<compile_context>
chip_gen: v5e
topology: v5e:2x2
jax: 0.10.0
libtpu: 0.0.40
codegen_flags: <defaults>
</compile_context>

<pallas_src>
import jax
import jax.numpy as jnp
from jax import lax
from jax.experimental import pallas as pl
from jax.experimental.pallas import tpu as pltpu


def _make_simvq_kernel(n_e, sub_tn, n_sub):
    """Builds the kernel for one (batch, token-tile) grid step."""

    def kernel(z_ref, cb_ref, cbsq_ref, zq_ref, idx_ref, sse_ref):
        # z_ref:    (e_dim, tn)   z tile, tokens on the lane axis
        # cb_ref:   (n_e, e_dim)  projected codebook (precomputed in wrapper)
        # cbsq_ref: (n_e, 1)      0.5 * |cb_k|^2 (precomputed in wrapper)
        # zq_ref:   (e_dim, tn)   quantized output (lane-dense)
        # idx_ref:  (1, tn)       argmin indices (lane-dense)
        # sse_ref:  (8, 128)      per-tile partial sum of squared error
        cb = cb_ref[...]                                       # (n_e, e_dim) f32
        cbsq = cbsq_ref[...]                                   # (n_e, 1)     f32
        # (n_e, 1) iota; lane axis handled by broadcasting (keeps vregs small).
        row = lax.broadcasted_iota(jnp.int32, (n_e, 1), 0)

        def body(c, acc):
            start = pl.multiple_of(c * sub_tn, 128)
            zt = z_ref[:, pl.ds(start, sub_tn)].astype(jnp.float32)  # (e_dim, sub_tn)

            # cross[k, t] = cb_k . z_t
            cross = jnp.dot(cb, zt, preferred_element_type=jnp.float32)  # (n_e, sub_tn)

            # argmin_k |z_t - cb_k|^2  ==  argmin_k (0.5*|cb_k|^2 - cb_k . z_t)
            d = cbsq - cross                                          # (n_e, sub_tn)
            min_d = jnp.min(d, axis=0, keepdims=True)                 # (1, sub_tn)
            # first-index tie-break, like torch.argmin
            idx = jnp.min(jnp.where(d == min_d, row, n_e),
                          axis=0, keepdims=True)                      # (1, sub_tn)

            # gather z_q = cb[idx] via one-hot matmul (contract over n_e)
            onehot = (row == idx).astype(jnp.float32)                 # (n_e, sub_tn)
            zq = lax.dot_general(cb, onehot,
                                 dimension_numbers=(((0,), (0,)), ((), ())),
                                 preferred_element_type=jnp.float32)  # (e_dim, sub_tn)

            zq_ref[:, pl.ds(start, sub_tn)] = zq.astype(zq_ref.dtype)
            idx_ref[:, pl.ds(start, sub_tn)] = idx

            diff = zq - zt                                            # f32, in-vreg
            return acc + jnp.sum(diff * diff)

        total = lax.fori_loop(0, n_sub, body, jnp.float32(0.0), unroll=True)
        # Lane-dense (8,128) partial-SSE block; wrapper reads element [0, 0].
        sse_ref[...] = jnp.full((8, 128), total, jnp.float32)

    return kernel


def simvq_forward(z, emb, wp, bp, *, beta=0.25, legacy=True, tn=2048, sub_tn=256):
    """SimVQ.forward.  z: (B, C, H, W) with C == e_dim.

    Returns ((z_q, zero, min_encoding_indices),
             (per_sample_entropy, codebook_entropy, commitment, avg_probs))
    matching the PyTorch module's forward outputs (values only).
    """
    B, C, H, W = z.shape
    e_dim = C
    n_e = emb.shape[0]
    HW = H * W

    # --- hoisted codebook projection (computed once, outside the kernel) ---
    cb = (jnp.dot(emb, wp.T) + bp[None, :]).astype(jnp.float32)     # (n_e, e_dim)
    cb_half_sq = 0.5 * jnp.sum(cb * cb, axis=1, keepdims=True)      # (n_e, 1)

    # --- zero-copy (B, e_dim, HW) view: no HBM transpose ---
    z3 = z.reshape(B, e_dim, HW)

    tn = min(tn, HW)
    sub_tn = min(sub_tn, tn)
    assert HW % tn == 0, "H*W must be a multiple of the row tile"
    assert tn % 128 == 0 and sub_tn % 128 == 0 and tn % sub_tn == 0
    n_tiles = HW // tn
    n_sub = tn // sub_tn

    kernel = _make_simvq_kernel(n_e, sub_tn, n_sub)

    zq3, idx3, sse_part = pl.pallas_call(
        kernel,
        grid_spec=pltpu.PrefetchScalarGridSpec(
            num_scalar_prefetch=0,
            grid=(B, n_tiles),
            in_specs=[
                pl.BlockSpec((None, e_dim, tn), lambda b, i: (b, 0, i)),  # z tile
                pl.BlockSpec((n_e, e_dim), lambda b, i: (0, 0)),          # cb
                pl.BlockSpec((n_e, 1), lambda b, i: (0, 0)),              # 0.5*|cb|^2
            ],
            out_specs=[
                pl.BlockSpec((None, e_dim, tn), lambda b, i: (b, 0, i)),  # z_q
                pl.BlockSpec((None, 1, tn), lambda b, i: (b, 0, i)),      # indices
                pl.BlockSpec((None, None, 8, 128),
                             lambda b, i: (b, i, 0, 0)),                  # partial SSE
            ],
        ),
        out_shape=[
            jax.ShapeDtypeStruct((B, e_dim, HW), z.dtype),
            jax.ShapeDtypeStruct((B, 1, HW), jnp.int32),
            jax.ShapeDtypeStruct((B, n_tiles, 8, 128), jnp.float32),
        ],
        compiler_params=pltpu.CompilerParams(
            dimension_semantics=("parallel", "parallel")),
    )(z3, cb, cb_half_sq)

    # indices in (b, h, w) order, same as the PyTorch 'b c h w -> b h w c' flatten
    min_encoding_indices = idx3.reshape(-1)

    # --- fused commitment loss: tiny finish-up sum over per-tile partials ---
    sse = jnp.sum(sse_part[:, :, 0, 0])
    # legacy:     mean((zq.detach()-z)^2) + beta*mean((zq-z.detach())^2)
    # non-legacy: beta*mean(...) + mean(...)
    # forward *value* is (1+beta)*mse in both cases.
    commit_loss = (1.0 + beta) * sse / jnp.float32(B * HW * e_dim)

    # straight-through: z + (z_q - z).detach() has forward value z_q
    z_q = zq3.reshape(B, e_dim, H, W)                                 # zero-copy

    zero = jnp.float32(0.0)
    return ((z_q, zero, min_encoding_indices),
            (zero, zero, commit_loss, zero))


def _reference(z, emb, wp, bp, beta=0.25):
    """Pure-JAX reference of the same forward, for a sanity check."""
    B, C, H, W = z.shape
    z_nhwc = jnp.transpose(z, (0, 2, 3, 1))
    zf = z_nhwc.reshape(-1, C)
    cb = emb @ wp.T + bp
    d = (jnp.sum(zf**2, axis=1, keepdims=True) + jnp.sum(cb**2, axis=1)
         - 2.0 * zf @ cb.T)
    idx = jnp.argmin(d, axis=1)
    zq = cb[idx]
    loss = (1.0 + beta) * jnp.mean((zq - zf) ** 2)
    zq = jnp.transpose(zq.reshape(B, H, W, C), (0, 3, 1, 2))
    return zq, idx.astype(jnp.int32), loss


if __name__ == "__main__":
    # Module config (small synthetic sizes): n_e codes, e_dim channels.
    n_e, e_dim, beta = 128, 4, 0.25
    B, H, W = 2, 16, 16

    key = jax.random.PRNGKey(0)
    k_z, k_emb, k_w, k_b = jax.random.split(key, 4)

    # nn.Embedding weight ~ N(0, e_dim^-0.5); nn.Linear default ~ U(-1/sqrt(in), 1/sqrt(in))
    emb = jax.random.normal(k_emb, (n_e, e_dim), jnp.float32) * (e_dim ** -0.5)
    bound = 1.0 / (e_dim ** 0.5)
    wp = jax.random.uniform(k_w, (e_dim, e_dim), jnp.float32, -bound, bound)
    bp = jax.random.uniform(k_b, (e_dim,), jnp.float32, -bound, bound)

    z = jax.random.normal(k_z, (B, e_dim, H, W), jnp.float32)

    # tn clamps to HW=256 at this size -> grid (B, 1); sub_tn=128 exercises the
    # in-kernel sub-chunk loop.
    (z_q, zero, indices), (pse, cbe, commit, avgp) = simvq_forward(
        z, emb, wp, bp, beta=beta, tn=2048, sub_tn=128)
    jax.block_until_ready((z_q, indices, commit))

    # sanity check against pure-JAX reference
    zq_ref, idx_ref, loss_ref = _reference(z, emb, wp, bp, beta)
    assert jnp.allclose(z_q, zq_ref, atol=1e-5), "z_q mismatch"
    assert jnp.all(indices == idx_ref), "indices mismatch"
    assert jnp.allclose(commit, loss_ref, rtol=1e-4, atol=1e-5), "commit loss mismatch"

    print("KERNEL_OK")
</pallas_src>

<mosaic_0001>
module attributes {stable_mosaic.version = 11 : i64} {
  func.func @kernel(%arg0: i32, %arg1: i32, %arg2: memref<1x4x256xf32, #tpu.memory_space<vmem>>, %arg3: memref<128x4xf32, #tpu.memory_space<vmem>>, %arg4: memref<128x1xf32, #tpu.memory_space<vmem>>, %arg5: memref<1x4x256xf32, #tpu.memory_space<vmem>>, %arg6: memref<1x1x256xi32, #tpu.memory_space<vmem>>, %arg7: memref<1x1x8x128xf32, #tpu.memory_space<vmem>>) attributes {dimension_semantics = [#tpu.dimension_semantics<parallel>, #tpu.dimension_semantics<parallel>], iteration_bounds = array<i64: 2, 1>, scalar_prefetch = 0 : i64, scratch_operands = 0 : i64, tpu.core_type = #tpu.core_type<tc>, window_params = [{transform_indices = @transform_0, window_bounds = array<i64: 1, 4, 256>}, {pipeline_mode = #tpu.pipeline_mode<synchronous>, transform_indices = @transform_1, window_bounds = array<i64: 128, 4>}, {pipeline_mode = #tpu.pipeline_mode<synchronous>, transform_indices = @transform_2, window_bounds = array<i64: 128, 1>}, {transform_indices = @transform_3, window_bounds = array<i64: 1, 4, 256>}, {transform_indices = @transform_4, window_bounds = array<i64: 1, 1, 256>}, {transform_indices = @transform_5, window_bounds = array<i64: 1, 1, 8, 128>}]} {
    %c0 = arith.constant 0 : index
    %c0_0 = arith.constant 0 : index
    %0 = vector.load %arg3[%c0, %c0_0] : memref<128x4xf32, #tpu.memory_space<vmem>>, vector<128x4xf32>
    %c0_1 = arith.constant 0 : index
    %c0_2 = arith.constant 0 : index
    %1 = vector.load %arg4[%c0_1, %c0_2] : memref<128x1xf32, #tpu.memory_space<vmem>>, vector<128x1xf32>
    %2 = tpu.iota {dimensions = array<i32: 0>} : vector<128x1xi32>
    %cst = arith.constant 0.000000e+00 : f32
    %c0_i32 = arith.constant 0 : i32
    %c128_i32 = arith.constant 128 : i32
    %3 = arith.muli %c0_i32, %c128_i32 : i32
    %4 = tpu.assume_multiple %3, 128 : i32
    %c0_3 = arith.constant 0 : index
    %c0_4 = arith.constant 0 : index
    %5 = arith.index_cast %4 : i32 to index
    %6 = vector.load %arg2[%c0_3, %c0_4, %5] : memref<1x4x256xf32, #tpu.memory_space<vmem>>, vector<1x4x128xf32>
    %7 = vector.shape_cast %6 : vector<1x4x128xf32> to vector<4x128xf32>
    %cst_5 = arith.constant dense<0.000000e+00> : vector<128x128xf32>
    %8 = tpu.matmul %0, %7, %cst_5 {dimension_numbers = #tpu.dot_dimension_numbers<[1], [0], [0], [1], [0, 0, 1, 1], [], []>} : vector<128x4xf32>, vector<4x128xf32>, vector<128x128xf32> -> vector<128x128xf32>
    %9 = vector.broadcast %1 : vector<128x1xf32> to vector<128x128xf32>
    %10 = arith.subf %9, %8 : vector<128x128xf32>
    %cst_6 = arith.constant dense<0x7F800000> : vector<128xf32>
    %11 = vector.multi_reduction <minimumf>, %10, %cst_6 [0] : vector<128x128xf32> to vector<128xf32>
    %12 = vector.shape_cast %11 : vector<128xf32> to vector<1x128xf32>
    %13 = vector.broadcast %12 : vector<1x128xf32> to vector<128x128xf32>
    %14 = arith.cmpf oeq, %10, %13 : vector<128x128xf32>
    %c128_i32_7 = arith.constant 128 : i32
    %15 = vector.shape_cast %2 : vector<128x1xi32> to vector<128x1xi32>
    %16 = vector.broadcast %15 : vector<128x1xi32> to vector<128x128xi32>
    %17 = vector.broadcast %c128_i32_7 : i32 to vector<128x128xi32>
    %18 = arith.select %14, %16, %17 : vector<128x128xi1>, vector<128x128xi32>
    %cst_8 = arith.constant dense<2147483647> : vector<128xi32>
    %19 = vector.multi_reduction <minsi>, %18, %cst_8 [0] : vector<128x128xi32> to vector<128xi32>
    %20 = vector.shape_cast %19 : vector<128xi32> to vector<1x128xi32>
    %21 = vector.broadcast %2 : vector<128x1xi32> to vector<128x128xi32>
    %22 = vector.broadcast %20 : vector<1x128xi32> to vector<128x128xi32>
    %23 = arith.cmpi eq, %21, %22 : vector<128x128xi32>
    %24 = arith.extui %23 : vector<128x128xi1> to vector<128x128xi32>
    %25 = arith.sitofp %24 : vector<128x128xi32> to vector<128x128xf32>
    %cst_9 = arith.constant dense<0.000000e+00> : vector<4x128xf32>
    %26 = tpu.matmul %0, %25, %cst_9 {dimension_numbers = #tpu.dot_dimension_numbers<[0], [0], [1], [1], [0, 1, 1, 1], [], []>} : vector<128x4xf32>, vector<128x128xf32>, vector<4x128xf32> -> vector<4x128xf32>
    %c0_10 = arith.constant 0 : index
    %c0_11 = arith.constant 0 : index
    %27 = arith.index_cast %4 : i32 to index
    %28 = vector.load %arg5[%c0_10, %c0_11, %27] : memref<1x4x256xf32, #tpu.memory_space<vmem>>, vector<1x4x128xf32>
    %29 = vector.shape_cast %28 : vector<1x4x128xf32> to vector<4x128xf32>
    %30 = vector.shape_cast %26 : vector<4x128xf32> to vector<1x4x128xf32>
    tpu.vector_store %arg5[%c0_10, %c0_11, %27], %30 {strides = array<i32>} : memref<1x4x256xf32, #tpu.memory_space<vmem>>, vector<1x4x128xf32>,
    %c0_12 = arith.constant 0 : index
    %c0_13 = arith.constant 0 : index
    %31 = arith.index_cast %4 : i32 to index
    %32 = vector.load %arg6[%c0_12, %c0_13, %31] : memref<1x1x256xi32, #tpu.memory_space<vmem>>, vector<1x1x128xi32>
    %33 = vector.shape_cast %32 : vector<1x1x128xi32> to vector<1x128xi32>
    %34 = vector.shape_cast %20 : vector<1x128xi32> to vector<1x1x128xi32>
    tpu.vector_store %arg6[%c0_12, %c0_13, %31], %34 {strides = array<i32>} : memref<1x1x256xi32, #tpu.memory_space<vmem>>, vector<1x1x128xi32>,
    %35 = arith.subf %26, %7 : vector<4x128xf32>
    %36 = arith.mulf %35, %35 : vector<4x128xf32>
    %37 = vector.shape_cast %36 : vector<4x128xf32> to vector<1x4x128xf32>
    %cst_14 = arith.constant dense<0.000000e+00> : vector<1xf32>
    %38 = vector.multi_reduction <add>, %37, %cst_14 [1, 2] : vector<1x4x128xf32> to vector<1xf32>
    %39 = vector.shape_cast %38 : vector<1xf32> to vector<1x1x1xf32>
    %40 = vector.extract %39[0, 0, 0] : f32 from vector<1x1x1xf32>
    %41 = arith.addf %cst, %40 : f32
    %c1_i32 = arith.constant 1 : i32
    %c128_i32_15 = arith.constant 128 : i32
    %42 = arith.muli %c1_i32, %c128_i32_15 : i32
    %43 = tpu.assume_multiple %42, 128 : i32
    %c0_16 = arith.constant 0 : index
    %c0_17 = arith.constant 0 : index
    %44 = arith.index_cast %43 : i32 to index
    %45 = vector.load %arg2[%c0_16, %c0_17, %44] : memref<1x4x256xf32, #tpu.memory_space<vmem>>, vector<1x4x128xf32>
    %46 = vector.shape_cast %45 : vector<1x4x128xf32> to vector<4x128xf32>
    %cst_18 = arith.constant dense<0.000000e+00> : vector<128x128xf32>
    %47 = tpu.matmul %0, %46, %cst_18 {dimension_numbers = #tpu.dot_dimension_numbers<[1], [0], [0], [1], [0, 0, 1, 1], [], []>} : vector<128x4xf32>, vector<4x128xf32>, vector<128x128xf32> -> vector<128x128xf32>
    %48 = vector.broadcast %1 : vector<128x1xf32> to vector<128x128xf32>
    %49 = arith.subf %48, %47 : vector<128x128xf32>
    %cst_19 = arith.constant dense<0x7F800000> : vector<128xf32>
    %50 = vector.multi_reduction <minimumf>, %49, %cst_19 [0] : vector<128x128xf32> to vector<128xf32>
    %51 = vector.shape_cast %50 : vector<128xf32> to vector<1x128xf32>
    %52 = vector.broadcast %51 : vector<1x128xf32> to vector<128x128xf32>
    %53 = arith.cmpf oeq, %49, %52 : vector<128x128xf32>
    %c128_i32_20 = arith.constant 128 : i32
    %54 = vector.shape_cast %2 : vector<128x1xi32> to vector<128x1xi32>
    %55 = vector.broadcast %54 : vector<128x1xi32> to vector<128x128xi32>
    %56 = vector.broadcast %c128_i32_20 : i32 to vector<128x128xi32>
    %57 = arith.select %53, %55, %56 : vector<128x128xi1>, vector<128x128xi32>
    %cst_21 = arith.constant dense<2147483647> : vector<128xi32>
    %58 = vector.multi_reduction <minsi>, %57, %cst_21 [0] : vector<128x128xi32> to vector<128xi32>
    %59 = vector.shape_cast %58 : vector<128xi32> to vector<1x128xi32>
    %60 = vector.broadcast %2 : vector<128x1xi32> to vector<128x128xi32>
    %61 = vector.broadcast %59 : vector<1x128xi32> to vector<128x128xi32>
    %62 = arith.cmpi eq, %60, %61 : vector<128x128xi32>
    %63 = arith.extui %62 : vector<128x128xi1> to vector<128x128xi32>
    %64 = arith.sitofp %63 : vector<128x128xi32> to vector<128x128xf32>
    %cst_22 = arith.constant dense<0.000000e+00> : vector<4x128xf32>
    %65 = tpu.matmul %0, %64, %cst_22 {dimension_numbers = #tpu.dot_dimension_numbers<[0], [0], [1], [1], [0, 1, 1, 1], [], []>} : vector<128x4xf32>, vector<128x128xf32>, vector<4x128xf32> -> vector<4x128xf32>
    %c0_23 = arith.constant 0 : index
    %c0_24 = arith.constant 0 : index
    %66 = arith.index_cast %43 : i32 to index
    %67 = vector.load %arg5[%c0_23, %c0_24, %66] : memref<1x4x256xf32, #tpu.memory_space<vmem>>, vector<1x4x128xf32>
    %68 = vector.shape_cast %67 : vector<1x4x128xf32> to vector<4x128xf32>
    %69 = vector.shape_cast %65 : vector<4x128xf32> to vector<1x4x128xf32>
    tpu.vector_store %arg5[%c0_23, %c0_24, %66], %69 {strides = array<i32>} : memref<1x4x256xf32, #tpu.memory_space<vmem>>, vector<1x4x128xf32>,
    %c0_25 = arith.constant 0 : index
    %c0_26 = arith.constant 0 : index
    %70 = arith.index_cast %43 : i32 to index
    %71 = vector.load %arg6[%c0_25, %c0_26, %70] : memref<1x1x256xi32, #tpu.memory_space<vmem>>, vector<1x1x128xi32>
    %72 = vector.shape_cast %71 : vector<1x1x128xi32> to vector<1x128xi32>
    %73 = vector.shape_cast %59 : vector<1x128xi32> to vector<1x1x128xi32>
    tpu.vector_store %arg6[%c0_25, %c0_26, %70], %73 {strides = array<i32>} : memref<1x1x256xi32, #tpu.memory_space<vmem>>, vector<1x1x128xi32>,
    %74 = arith.subf %65, %46 : vector<4x128xf32>
    %75 = arith.mulf %74, %74 : vector<4x128xf32>
    %76 = vector.shape_cast %75 : vector<4x128xf32> to vector<1x4x128xf32>
    %cst_27 = arith.constant dense<0.000000e+00> : vector<1xf32>
    %77 = vector.multi_reduction <add>, %76, %cst_27 [1, 2] : vector<1x4x128xf32> to vector<1xf32>
    %78 = vector.shape_cast %77 : vector<1xf32> to vector<1x1x1xf32>
    %79 = vector.extract %78[0, 0, 0] : f32 from vector<1x1x1xf32>
    %80 = arith.addf %41, %79 : f32
    %c2_i32 = arith.constant 2 : i32
    %81 = vector.broadcast %80 : f32 to vector<8x128xf32>
    %c0_28 = arith.constant 0 : index
    %c0_29 = arith.constant 0 : index
    %c0_30 = arith.constant 0 : index
    %c0_31 = arith.constant 0 : index
    %82 = vector.load %arg7[%c0_28, %c0_29, %c0_30, %c0_31] : memref<1x1x8x128xf32, #tpu.memory_space<vmem>>, vector<1x1x8x128xf32>
    %83 = vector.shape_cast %82 : vector<1x1x8x128xf32> to vector<8x128xf32>
    %84 = vector.shape_cast %81 : vector<8x128xf32> to vector<1x1x8x128xf32>
    tpu.vector_store %arg7[%c0_28, %c0_29, %c0_30, %c0_31], %84 {strides = array<i32>} : memref<1x1x8x128xf32, #tpu.memory_space<vmem>>, vector<1x1x8x128xf32>,
    return
  }
  func.func @transform_0(%arg0: i32, %arg1: i32) -> (i32, i32, i32) {
    %c0_i32 = arith.constant 0 : i32
    %c0_i32_0 = arith.constant 0 : i32
    return %arg0, %c0_i32, %arg1 : i32, i32, i32
  }
  func.func @transform_1(%arg0: i32, %arg1: i32) -> (i32, i32) {
    %c0_i32 = arith.constant 0 : i32
    %c0_i32_0 = arith.constant 0 : i32
    %c0_i32_1 = arith.constant 0 : i32
    return %c0_i32, %c0_i32_0 : i32, i32
  }
  func.func @transform_2(%arg0: i32, %arg1: i32) -> (i32, i32) {
    %c0_i32 = arith.constant 0 : i32
    %c0_i32_0 = arith.constant 0 : i32
    %c0_i32_1 = arith.constant 0 : i32
    return %c0_i32, %c0_i32_0 : i32, i32
  }
  func.func @transform_3(%arg0: i32, %arg1: i32) -> (i32, i32, i32) {
    %c0_i32 = arith.constant 0 : i32
    %c0_i32_0 = arith.constant 0 : i32
    return %arg0, %c0_i32, %arg1 : i32, i32, i32
  }
  func.func @transform_4(%arg0: i32, %arg1: i32) -> (i32, i32, i32) {
    %c0_i32 = arith.constant 0 : i32
    %c0_i32_0 = arith.constant 0 : i32
    return %arg0, %c0_i32, %arg1 : i32, i32, i32
  }
  func.func @transform_5(%arg0: i32, %arg1: i32) -> (i32, i32, i32, i32) {
    %c0_i32 = arith.constant 0 : i32
    %c0_i32_0 = arith.constant 0 : i32
    %c0_i32_1 = arith.constant 0 : i32
    return %arg0, %arg1, %c0_i32, %c0_i32_0 : i32, i32, i32, i32
  }
}

</mosaic_0001>

<llo_original>
// kernel: tpu_custom_call.1
$region0: #{tpu_custom_call.1}
  #allocation0 [shape = 'u32[]', space=smem, size = 0x4, offset = 0x4, fixed_abs, tag = 'smem constant byte address 0x4 - core index']
  #allocation1 [shape = 'u32[72,128]{1,0:T(1,128)}', space=vmem, size = 0x9000, scoped, tag = 'internal scratch']
  %s0 = inlined_call_operand.vmem [shape: f32[2,4,256], index: 0, kind: input, shape index: {}]
  %s1 = inlined_call_operand.vmem [shape: f32[128,4], index: 1, kind: input, shape index: {}]
  %s2 = inlined_call_operand.vmem [shape: f32[128,1], index: 2, kind: input, shape index: {}]
  %s3 = inlined_call_operand.hbm [shape: f32[2,4,256], index: 3, kind: output, shape index: {0}]
  %s4 = inlined_call_operand.hbm [shape: s32[2,1,256], index: 4, kind: output, shape index: {1}]
  %s5 = inlined_call_operand.hbm [shape: f32[2,1,8,128], index: 5, kind: output, shape index: {2}]
  %6 = xla_tuple %s3, %s4, %s5
  %s7 = sld [smem:[#allocation0]]
  $region61: #{tpu_custom_call.1} parent=0
    _
  %s9 = ssub.s32 1, %s7
  %s10 = scalar_select 0, %s9, %s7
  $region1: #{tpu_custom_call.1} parent=0
    #allocation2 [shape = 'u8[8192]{0}', space=vmem, size = 0x2000, scoped, tag = 'output window, operand 0']
    #allocation3 [shape = 's32[2]{0}', space=sflag, size = 0x8, scoped, tag = 'scoped memory for tpu_custom_call.1']
    #allocation4 [shape = 'u8[2048]{0}', space=vmem, size = 0x800, scoped, tag = 'output window, operand 1']
    #allocation5 [shape = 's32[2]{0}', space=sflag, size = 0x8, scoped, tag = 'scoped memory for tpu_custom_call.1']
    #allocation6 [shape = 'u8[8192]{0}', space=vmem, size = 0x2000, scoped, tag = 'output window, operand 2']
    %11 = vsyncpa [#allocation3], 0
    %s12 = scalar_lea.sflag [#allocation3], 1
    %13 = vsyncpa %s12, 0
    %14 = vsyncpa [#allocation5], 0
    %s15 = scalar_lea.sflag [#allocation5], 1
    %16 = vsyncpa %s15, 0
    loop: start=0, step=1, limit=4
    $region2: #{tpu_custom_call.1} parent=1 // loop_pre_header
      _
    $region3: #{tpu_custom_call.1} parent=1 // loop_header
      %s18 = sphi 0, %s22
      %p19 = scmp.ge.s32.totalorder %s18, 4
      %s25 = sphi 0, %s37
      %s26 = sphi 0, %s33
      %s27 = sphi 0, %s25
      %s28 = sphi 0, %s26
      %s29 = sphi 0, %s27
      %s30 = sphi 0, %s28
      %s42 = sphi 0, %s44
      %s45 = sphi 0, %s42
      %s46 = sphi 0, %s45
      %s62 = sphi 0, %s46
      %s66 = sphi 0, %s66
      %s68 = sphi 0, %s66
      %s69 = sphi 0, %s68
      %s83 = sphi 0, %s69
      %s87 = sphi 0, %s87
      %s89 = sphi 0, %s87
      %s90 = sphi 0, %s89
      %s104 = sphi 0, %s90
      %s112 = sphi 0, %s114
      %s115 = sphi 0, %s112
      %s116 = sphi 0, %s115
      %s132 = sphi 0, %s116
      %s140 = sphi 0, %s142
      %s143 = sphi 0, %s140
      %s144 = sphi 0, %s143
      %s160 = sphi 0, %s144
      %s168 = sphi 0, %s170
      %s171 = sphi 0, %s168
      %s172 = sphi 0, %s171
      %s188 = sphi 0, %s172
    $region4: #{tpu_custom_call.1} parent=1 // loop_header_branch
      %21 = sbr.rel (%p19) target = $region8
    $region5: #{tpu_custom_call.1} parent=1 // loop_body
      %s23 = ssub.s32 %s18, 1
      %s24 = ssub.s32 %s18, 2
      %s31 = sadd.s32 1, %s26
      %p32 = scmp.ge.s32.totalorder %s31, 1
      %s33 = scalar_select %p32, 0, %s31
      %s34 = sadd.s32 1, %s25
      %s35 = scalar_select %p32, %s34, %s25
      %p36 = scmp.ge.s32.totalorder %s35, 2
      %s37 = scalar_select %p36, 0, %s35
      %s38 = ssub.s32 %s25, %s37
      %s39 = ssub.s32 %s26, %s33
      %s40 = sor.u32 %s38, %s39
      %p41 = scmp.eq.s32.totalorder %s40, 0
      %s43 = sadd.s32 %s42, 1
      %s44 = scalar_select %p41, %s42, %s43
      %p47 = pneg %p41
      %p48 = scmp.eq.s32.totalorder %s18, 1
      %p49 = por %p47, %p48
      %p50 = scmp.ne.s32.totalorder %s42, %s45
      %p51 = scmp.eq.s32.totalorder %s18, 0
      %p52 = por %p50, %p51
      %p53 = scmp.ne.s32.totalorder %s42, %s45
      %p54 = scmp.eq.s32.totalorder %s23, 1
      %p55 = por %p53, %p54
      %p56 = scmp.ne.s32.totalorder %s45, %s46
      %p57 = scmp.eq.s32.totalorder %s23, 0
      %p58 = por %p56, %p57
      %p59 = scmp.ne.s32.totalorder %s45, %s46
      %p60 = scmp.eq.s32.totalorder %s24, 1
      %p61 = por %p59, %p60
      %p63 = scmp.ne.s32.totalorder %s46, %s62
      %p64 = scmp.eq.s32.totalorder %s24, 0
      %p65 = por %p63, %p64
      %s67 = sadd.s32 %s66, 1
      %p70 = scmp.eq.s32.totalorder %s18, 1
      %p71 = scmp.ne.s32.totalorder %s66, %s68
      %p72 = scmp.eq.s32.totalorder %s18, 0
      %p73 = por %p71, %p72
      %p74 = scmp.ne.s32.totalorder %s66, %s68
      %p75 = scmp.eq.s32.totalorder %s23, 1
      %p76 = por %p74, %p75
      %p77 = scmp.ne.s32.totalorder %s68, %s69
      %p78 = scmp.eq.s32.totalorder %s23, 0
      %p79 = por %p77, %p78
      %p80 = scmp.ne.s32.totalorder %s68, %s69
      %p81 = scmp.eq.s32.totalorder %s24, 1
      %p82 = por %p80, %p81
      %p84 = scmp.ne.s32.totalorder %s69, %s83
      %p85 = scmp.eq.s32.totalorder %s24, 0
      %p86 = por %p84, %p85
      %s88 = sadd.s32 %s87, 1
      %p91 = scmp.eq.s32.totalorder %s18, 1
      %p92 = scmp.ne.s32.totalorder %s87, %s89
      %p93 = scmp.eq.s32.totalorder %s18, 0
      %p94 = por %p92, %p93
      %p95 = scmp.ne.s32.totalorder %s87, %s89
      %p96 = scmp.eq.s32.totalorder %s23, 1
      %p97 = por %p95, %p96
      %p98 = scmp.ne.s32.totalorder %s89, %s90
      %p99 = scmp.eq.s32.totalorder %s23, 0
      %p100 = por %p98, %p99
      %p101 = scmp.ne.s32.totalorder %s89, %s90
      %p102 = scmp.eq.s32.totalorder %s24, 1
      %p103 = por %p101, %p102
      %p105 = scmp.ne.s32.totalorder %s90, %s104
      %p106 = scmp.eq.s32.totalorder %s24, 0
      %p107 = por %p105, %p106
      %s108 = ssub.s32 %s25, %s37
      %s109 = ssub.s32 %s26, %s33
      %s110 = sor.u32 %s108, %s109
      %p111 = scmp.eq.s32.totalorder %s110, 0
      %s113 = sadd.s32 %s112, 1
      %s114 = scalar_select %p111, %s112, %s113
      %p117 = pneg %p111
      %p118 = scmp.eq.s32.totalorder %s18, 1
      %p119 = por %p117, %p118
      %p120 = scmp.ne.s32.totalorder %s112, %s115
      %p121 = scmp.eq.s32.totalorder %s18, 0
      %p122 = por %p120, %p121
      %p123 = scmp.ne.s32.totalorder %s112, %s115
      %p124 = scmp.eq.s32.totalorder %s23, 1
      %p125 = por %p123, %p124
      %p126 = scmp.ne.s32.totalorder %s115, %s116
      %p127 = scmp.eq.s32.totalorder %s23, 0
      %p128 = por %p126, %p127
      %p129 = scmp.ne.s32.totalorder %s115, %s116
      %p130 = scmp.eq.s32.totalorder %s24, 1
      %p131 = por %p129, %p130
      %p133 = scmp.ne.s32.totalorder %s116, %s132
      %p134 = scmp.eq.s32.totalorder %s24, 0
      %p135 = por %p133, %p134
      %s136 = ssub.s32 %s25, %s37
      %s137 = ssub.s32 %s26, %s33
      %s138 = sor.u32 %s136, %s137
      %p139 = scmp.eq.s32.totalorder %s138, 0
      %s141 = sadd.s32 %s140, 1
      %s142 = scalar_select %p139, %s140, %s141
      %p145 = pneg %p139
      %p146 = scmp.eq.s32.totalorder %s18, 1
      %p147 = por %p145, %p146
      %p148 = scmp.ne.s32.totalorder %s140, %s143
      %p149 = scmp.eq.s32.totalorder %s18, 0
      %p150 = por %p148, %p149
      %p151 = scmp.ne.s32.totalorder %s140, %s143
      %p152 = scmp.eq.s32.totalorder %s23, 1
      %p153 = por %p151, %p152
      %p154 = scmp.ne.s32.totalorder %s143, %s144
      %p155 = scmp.eq.s32.totalorder %s23, 0
      %p156 = por %p154, %p155
      %p157 = scmp.ne.s32.totalorder %s143, %s144
      %p158 = scmp.eq.s32.totalorder %s24, 1
      %p159 = por %p157, %p158
      %p161 = scmp.ne.s32.totalorder %s144, %s160
      %p162 = scmp.eq.s32.totalorder %s24, 0
      %p163 = por %p161, %p162
      %s164 = ssub.s32 %s25, %s37
      %s165 = ssub.s32 %s26, %s33
      %s166 = sor.u32 %s164, %s165
      %p167 = scmp.eq.s32.totalorder %s166, 0
      %s169 = sadd.s32 %s168, 1
      %s170 = scalar_select %p167, %s168, %s169
      %p173 = pneg %p167
      %p174 = scmp.eq.s32.totalorder %s18, 1
      %p175 = por %p173, %p174
      %p176 = scmp.ne.s32.totalorder %s168, %s171
      %p177 = scmp.eq.s32.totalorder %s18, 0
      %p178 = por %p176, %p177
      %p179 = scmp.ne.s32.totalorder %s168, %s171
      %p180 = scmp.eq.s32.totalorder %s23, 1
      %p181 = por %p179, %p180
      %p182 = scmp.ne.s32.totalorder %s171, %s172
      %p183 = scmp.eq.s32.totalorder %s23, 0
      %p184 = por %p182, %p183
      %p185 = scmp.ne.s32.totalorder %s171, %s172
      %p186 = scmp.eq.s32.totalorder %s24, 1
      %p187 = por %p185, %p186
      %p189 = scmp.ne.s32.totalorder %s172, %s188
      %p190 = scmp.eq.s32.totalorder %s24, 0
      %p191 = por %p189, %p190
      %p192 = scmp.le.s32.totalorder 1, %s18
      %p193 = scmp.lt.s32.totalorder %s18, 3
      %p194 = pnand %p192, %p193
      %p195 = pneg %p194
      // Predicated region
      $region9: #{tpu_custom_call.1} parent=5 // pred_check
        _
      $region10: #{tpu_custom_call.1} parent=5 // pred_check_branch
        %197 = sbr.rel (%p194) target = $region12
      $region11: #{tpu_custom_call.1} parent=5 // pred_region
        %s198 = ssub.s32 %s18, 1
        // Predicated region
        $region13: #{tpu_custom_call.1} parent=11 // pred_check
          %p199 = pneg %p79
        $region14: #{tpu_custom_call.1} parent=11 // pred_check_branch
          %201 = sbr.rel (%p199) target = $region16
        $region15: #{tpu_custom_call.1} parent=11 // pred_region
          _
        $region16: #{tpu_custom_call.1} parent=11 // pred_fallthru
          _
        // Predicated region
        $region17: #{tpu_custom_call.1} parent=11 // pred_check
          %p202 = pneg %p100
        $region18: #{tpu_custom_call.1} parent=11 // pred_check_branch
          %204 = sbr.rel (%p202) target = $region20
        $region19: #{tpu_custom_call.1} parent=11 // pred_region
          _
        $region20: #{tpu_custom_call.1} parent=11 // pred_fallthru
          _
      $region12: #{tpu_custom_call.1} parent=5 // pred_fallthru
        _
      %p205 = scmp.lt.s32.totalorder %s18, 2
      // Predicated region
      $region21: #{tpu_custom_call.1} parent=5 // pred_check
        %p206 = pneg %p205
      $region22: #{tpu_custom_call.1} parent=5 // pred_check_branch
        %208 = sbr.rel (%p206) target = $region24
      $region23: #{tpu_custom_call.1} parent=5 // pred_region
        // Predicated region
        $region25: #{tpu_custom_call.1} parent=23 // pred_check
          %p209 = pneg %p52
        $region26: #{tpu_custom_call.1} parent=23 // pred_check_branch
          %211 = sbr.rel (%p209) target = $region28
        $region27: #{tpu_custom_call.1} parent=23 // pred_region
          %s212 = smul.u32 2, %s26
          %p213 = scmp.lt.s32.totalorder %s25, 1
          %s214 = scalar_select %p213, %s25, 1
          %p215 = scmp.lt.s32.totalorder %s212, 1
          %s216 = scalar_select %p215, %s212, 1
          %s217 = smul.addr %s214, 2
          %s218 = sadd.s32 %s216, %s217
          %s219 = smul.addr %s218, 4
          %s220 = scalar_lea.vmem %s0, %s219
          %s221 = smul.u32 2, %s26
        $region28: #{tpu_custom_call.1} parent=23 // pred_fallthru
          _
      $region24: #{tpu_custom_call.1} parent=5 // pred_fallthru
        _
      %p222 = scmp.le.s32.totalorder 1, %s18
      %p223 = scmp.lt.s32.totalorder %s18, 3
      %p224 = pnand %p222, %p223
      %p225 = pneg %p224
      // Predicated region
      $region29: #{tpu_custom_call.1} parent=5 // pred_check
        _
      $region30: #{tpu_custom_call.1} parent=5 // pred_check_branch
        %227 = sbr.rel (%p224) target = $region32
      $region31: #{tpu_custom_call.1} parent=5 // pred_region
        %s228 = ssub.s32 %s18, 1
        %s229 = smul.u32 2, %s28
        %p230 = scmp.lt.s32.totalorder %s27, 1
        %s231 = scalar_select %p230, %s27, 1
        %p232 = scmp.lt.s32.totalorder %s229, 1
        %s233 = scalar_select %p232, %s229, 1
        %s234 = smul.addr %s231, 2
        %s235 = sadd.s32 %s233, %s234
        %s236 = smul.addr %s235, 4
        %s237 = scalar_lea.vmem %s0, %s236
        %p238 = pneg %p58
        %p239 = pneg %p55
        %p240 = pneg %p79
        %p241 = pneg %p76
        %p242 = pneg %p100
        %p243 = pneg %p97
        %p244 = pneg %p128
        %p245 = pneg %p125
        %s246 = sand.u32 %s115, 1
        %s247 = scalar_lea.sflag [#allocation3], %s246
        %s248 = sand.u32 %s115, 1
        %s249 = smul.addr %s248, 8
        %s250 = scalar_lea.vmem [#allocation2], %s249
        %p251 = pneg %p156
        %p252 = pneg %p153
        %s253 = sand.u32 %s23, 1
        %s254 = scalar_lea.sflag [#allocation5], %s253
        %s255 = sand.u32 %s143, 1
        %s256 = smul.addr %s255, 2
        %s257 = scalar_lea.vmem [#allocation4], %s256
        %p258 = pneg %p184
        %p259 = pneg %p181
        %s260 = sand.u32 %s23, 1
        %s261 = scalar_lea.sflag [#allocation5], %s260
        %s262 = sand.u32 %s171, 1
        %s263 = smul.addr %s262, 8
        %s264 = scalar_lea.vmem [#allocation6], %s263
        %s265 = smul.u32 2, %s28
        %p266 = scmp.lt.s32.totalorder %s27, 1
        %s267 = scalar_select %p266, %s27, 1
        %p268 = scmp.lt.s32.totalorder %s265, 1
        %s269 = scalar_select %p268, %s265, 1
        %s270 = smul.addr %s267, 2
        %s271 = sadd.s32 %s269, %s270
        %s272 = smul.addr %s271, 4
        %s273 = scalar_lea.vmem %s0, %s272
        %s274 = smul.u32 2, %s28
        %s275 = smul.u32 2, %s28
        %s276 = smul.u32 2, %s28
        %v277 = vld [vmem:[%s1] sm:$0xff]
        %v278 = vld [vmem:[%s1 + $0x8] sm:$0xff]
        %v279 = vld [vmem:[%s1 + $0x10] sm:$0xff]
        %v280 = vld [vmem:[%s1 + $0x18] sm:$0xff]
        %v281 = vld [vmem:[%s1 + $0x20] sm:$0xff]
        %v282 = vld [vmem:[%s1 + $0x28] sm:$0xff]
        %v283 = vld [vmem:[%s1 + $0x30] sm:$0xff]
        %v284 = vld [vmem:[%s1 + $0x38] sm:$0xff]
        %v285 = vld [vmem:[%s1 + $0x40] sm:$0xff]
        %v286 = vld [vmem:[%s1 + $0x48] sm:$0xff]
        %v287 = vld [vmem:[%s1 + $0x50] sm:$0xff]
        %v288 = vld [vmem:[%s1 + $0x58] sm:$0xff]
        %v289 = vld [vmem:[%s1 + $0x60] sm:$0xff]
        %v290 = vld [vmem:[%s1 + $0x68] sm:$0xff]
        %v291 = vld [vmem:[%s1 + $0x70] sm:$0xff]
        %v292 = vld [vmem:[%s1 + $0x78] sm:$0xff]
        %v293 = vld [vmem:[%s2] sm:$0xff]
        %v294 = vld [vmem:[%s2 + $0x8] sm:$0xff]
        %v295 = vld [vmem:[%s2 + $0x10] sm:$0xff]
        %v296 = vld [vmem:[%s2 + $0x18] sm:$0xff]
        %v297 = vld [vmem:[%s2 + $0x20] sm:$0xff]
        %v298 = vld [vmem:[%s2 + $0x28] sm:$0xff]
        %v299 = vld [vmem:[%s2 + $0x30] sm:$0xff]
        %v300 = vld [vmem:[%s2 + $0x38] sm:$0xff]
        %v301 = vld [vmem:[%s2 + $0x40] sm:$0xff]
        %v302 = vld [vmem:[%s2 + $0x48] sm:$0xff]
        %v303 = vld [vmem:[%s2 + $0x50] sm:$0xff]
        %v304 = vld [vmem:[%s2 + $0x58] sm:$0xff]
        %v305 = vld [vmem:[%s2 + $0x60] sm:$0xff]
        %v306 = vld [vmem:[%s2 + $0x68] sm:$0xff]
        %v307 = vld [vmem:[%s2 + $0x70] sm:$0xff]
        %v308 = vld [vmem:[%s2 + $0x78] sm:$0xff]
        %v309 = vlaneseq
        %v310 = vshrl.u32 %v309, 7
        %v311 = vadd.s32 %v310, 8
        %v312 = vadd.s32 %v310, 16
        %v313 = vadd.s32 %v310, 24
        %v314 = vadd.s32 %v310, 32
        %v315 = vadd.s32 %v310, 40
        %v316 = vadd.s32 %v310, 48
        %v317 = vadd.s32 %v310, 56
        %v318 = vadd.s32 %v310, 64
        %v319 = vadd.s32 %v310, 72
        %v320 = vadd.s32 %v310, 80
        %v321 = vadd.s32 %v310, 88
        %v322 = vadd.s32 %v310, 96
        %v323 = vadd.s32 %v310, 104
        %v324 = vadd.s32 %v310, 112
        %v325 = vadd.s32 %v310, 120
        %v326 = vld [vmem:[%s273] sm:$0xf]
        %vm327 = vcmask 31744
        %v329 = vsel %vm327, %v277, 0
        %v332 = vsel %vm327, %v278, 0
        %v335 = vsel %vm327, %v279, 0
        %v338 = vsel %vm327, %v280, 0
        %v341 = vsel %vm327, %v281, 0
        %v344 = vsel %vm327, %v282, 0
        %v347 = vsel %vm327, %v283, 0
        %v350 = vsel %vm327, %v284, 0
        %v353 = vsel %vm327, %v285, 0
        %v356 = vsel %vm327, %v286, 0
        %v359 = vsel %vm327, %v287, 0
        %v362 = vsel %vm327, %v288, 0
        %v365 = vsel %vm327, %v289, 0
        %v368 = vsel %vm327, %v290, 0
        %v371 = vsel %vm327, %v291, 0
        %v374 = vsel %vm327, %v292, 0
        %vm376 = vcmask 1043456
        %v378 = vsel %vm376, %v326, 0
        %380 = vmatpush.msra.mxu0 0.0
        %381 = vmatpush.msra.mxu0 0.0
        %382 = vmatpush.msra.mxu0 0.0
        %383 = vmatpush.msra.mxu0 0.0
        %384 = vmatpush.msra.mxu0 0.0
        %385 = vmatpush.msra.mxu0 0.0
        %386 = vmatpush.msra.mxu0 0.0
        %387 = vmatpush.msra.mxu0 0.0
        %388 = vmatpush.msra.mxu0 0.0
        %389 = vmatpush.msra.mxu0 0.0
        %390 = vmatpush.msra.mxu0 0.0
        %391 = vmatpush.msra.mxu0 0.0
        %392 = vmatpush.msra.mxu0 0.0
        %393 = vmatpush.msra.mxu0 0.0
        %394 = vmatpush.msra.mxu0 0.0
        %395 = vmatpush.msra.mxu0 %v378
        %396 = vmatmul.f32.gmra.mxu0 %v329
        %v397 = vpop.f32.mrf.mxu0
        %v398 = vadd.f32 0.0, %v397
        %399 = vmatmul.f32.gmra.mxu0 %v332
        %v400 = vpop.f32.mrf.mxu0
        %v401 = vadd.f32 0.0, %v400
        %402 = vmatmul.f32.gmra.mxu0 %v335
        %v403 = vpop.f32.mrf.mxu0
        %v404 = vadd.f32 0.0, %v403
        %405 = vmatmul.f32.gmra.mxu0 %v338
        %v406 = vpop.f32.mrf.mxu0
        %v407 = vadd.f32 0.0, %v406
        %408 = vmatmul.f32.gmra.mxu0 %v341
        %v409 = vpop.f32.mrf.mxu0
        %v410 = vadd.f32 0.0, %v409
        %411 = vmatmul.f32.gmra.mxu0 %v344
        %v412 = vpop.f32.mrf.mxu0
        %v413 = vadd.f32 0.0, %v412
        %414 = vmatmul.f32.gmra.mxu0 %v347
        %v415 = vpop.f32.mrf.mxu0
        %v416 = vadd.f32 0.0, %v415
        %417 = vmatmul.f32.gmra.mxu0 %v350
        %v418 = vpop.f32.mrf.mxu0
        %v419 = vadd.f32 0.0, %v418
        %420 = vmatmul.f32.gmra.mxu0 %v353
        %v421 = vpop.f32.mrf.mxu0
        %v422 = vadd.f32 0.0, %v421
        %423 = vmatmul.f32.gmra.mxu0 %v356
        %v424 = vpop.f32.mrf.mxu0
        %v425 = vadd.f32 0.0, %v424
        %426 = vmatmul.f32.gmra.mxu0 %v359
        %v427 = vpop.f32.mrf.mxu0
        %v428 = vadd.f32 0.0, %v427
        %429 = vmatmul.f32.gmra.mxu0 %v362
        %v430 = vpop.f32.mrf.mxu0
        %v431 = vadd.f32 0.0, %v430
        %432 = vmatmul.f32.gmra.mxu0 %v365
        %v433 = vpop.f32.mrf.mxu0
        %v434 = vadd.f32 0.0, %v433
        %435 = vmatmul.f32.gmra.mxu0 %v368
        %v436 = vpop.f32.mrf.mxu0
        %v437 = vadd.f32 0.0, %v436
        %438 = vmatmul.f32.gmra.mxu0 %v371
        %v439 = vpop.f32.mrf.mxu0
        %v440 = vadd.f32 0.0, %v439
        %441 = vmatmul.f32.gmra.mxu0 %v374
        %v442 = vpop.f32.mrf.mxu0
        %v443 = vadd.f32 0.0, %v442
        %444 = vdwg.mxu0
        %446 = vset.pattern.permute.xlu0 0
        %447 = vperm.xlu0 %446, %v293
        %v448 = vpop.permute.xlu0 %447
        %451 = vset.pattern.permute.xlu0 0
        %452 = vperm.xlu0 %451, %v294
        %v453 = vpop.permute.xlu0 %452
        %456 = vset.pattern.permute.xlu0 0
        %457 = vperm.xlu0 %456, %v295
        %v458 = vpop.permute.xlu0 %457
        %461 = vset.pattern.permute.xlu0 0
        %462 = vperm.xlu0 %461, %v296
        %v463 = vpop.permute.xlu0 %462
        %466 = vset.pattern.permute.xlu0 0
        %467 = vperm.xlu0 %466, %v297
        %v468 = vpop.permute.xlu0 %467
        %471 = vset.pattern.permute.xlu0 0
        %472 = vperm.xlu0 %471, %v298
        %v473 = vpop.permute.xlu0 %472
        %476 = vset.pattern.permute.xlu0 0
        %477 = vperm.xlu0 %476, %v299
        %v478 = vpop.permute.xlu0 %477
        %481 = vset.pattern.permute.xlu0 0
        %482 = vperm.xlu0 %481, %v300
        %v483 = vpop.permute.xlu0 %482
        %486 = vset.pattern.permute.xlu0 0
        %487 = vperm.xlu0 %486, %v301
        %v488 = vpop.permute.xlu0 %487
        %491 = vset.pattern.permute.xlu0 0
        %492 = vperm.xlu0 %491, %v302
        %v493 = vpop.permute.xlu0 %492
        %496 = vset.pattern.permute.xlu0 0
        %497 = vperm.xlu0 %496, %v303
        %v498 = vpop.permute.xlu0 %497
        %501 = vset.pattern.permute.xlu0 0
        %502 = vperm.xlu0 %501, %v304
        %v503 = vpop.permute.xlu0 %502
        %506 = vset.pattern.permute.xlu0 0
        %507 = vperm.xlu0 %506, %v305
        %v508 = vpop.permute.xlu0 %507
        %511 = vset.pattern.permute.xlu0 0
        %512 = vperm.xlu0 %511, %v306
        %v513 = vpop.permute.xlu0 %512
        %516 = vset.pattern.permute.xlu0 0
        %517 = vperm.xlu0 %516, %v307
        %v518 = vpop.permute.xlu0 %517
        %521 = vset.pattern.permute.xlu0 0
        %522 = vperm.xlu0 %521, %v308
        %v523 = vpop.permute.xlu0 %522
        %v525 = vsub.f32 %v448, %v398
        %v526 = vsub.f32 %v453, %v401
        %v527 = vsub.f32 %v458, %v404
        %v528 = vsub.f32 %v463, %v407
        %v529 = vsub.f32 %v468, %v410
        %v530 = vsub.f32 %v473, %v413
        %v531 = vsub.f32 %v478, %v416
        %v532 = vsub.f32 %v483, %v419
        %v533 = vsub.f32 %v488, %v422
        %v534 = vsub.f32 %v493, %v425
        %v535 = vsub.f32 %v498, %v428
        %v536 = vsub.f32 %v503, %v431
        %v537 = vsub.f32 %v508, %v434
        %v538 = vsub.f32 %v513, %v437
        %v539 = vsub.f32 %v518, %v440
        %v540 = vsub.f32 %v523, %v443
        %v541 = vmin.f32 %v525, %v529
        %v542 = vmin.f32 %v526, %v530
        %v543 = vmin.f32 %v527, %v531
        %v544 = vmin.f32 %v528, %v532
        %v545 = vmin.f32 %v541, %v533
        %v546 = vmin.f32 %v542, %v534
        %v547 = vmin.f32 %v543, %v535
        %v548 = vmin.f32 %v544, %v536
        %v549 = vmin.f32 %v545, %v537
        %v550 = vmin.f32 %v546, %v538
        %v551 = vmin.f32 %v547, %v539
        %v552 = vmin.f32 %v548, %v540
        %v553 = vmin.f32 %v549, %v550
        %v554 = vmin.f32 %v551, %v552
        %v555 = vmin.f32 %v553, %v554
        %v556 = vrot.slane %v555, 4
        %v557 = vmin.f32 %v555, %v556
        %v558 = vrot.slane %v557, 2
        %v559 = vmin.f32 %v557, %v558
        %v560 = vrot.slane %v559, 1
        %v561 = vmin.f32 %v559, %v560
        %vm562 = vcmp.eq.f32.partialorder %v525, %v561
        %vm563 = vcmp.eq.f32.partialorder %v526, %v561
        %vm564 = vcmp.eq.f32.partialorder %v527, %v561
        %vm565 = vcmp.eq.f32.partialorder %v528, %v561
        %vm566 = vcmp.eq.f32.partialorder %v529, %v561
        %vm567 = vcmp.eq.f32.partialorder %v530, %v561
        %vm568 = vcmp.eq.f32.partialorder %v531, %v561
        %vm569 = vcmp.eq.f32.partialorder %v532, %v561
        %vm570 = vcmp.eq.f32.partialorder %v533, %v561
        %vm571 = vcmp.eq.f32.partialorder %v534, %v561
        %vm572 = vcmp.eq.f32.partialorder %v535, %v561
        %vm573 = vcmp.eq.f32.partialorder %v536, %v561
        %vm574 = vcmp.eq.f32.partialorder %v537, %v561
        %vm575 = vcmp.eq.f32.partialorder %v538, %v561
        %vm576 = vcmp.eq.f32.partialorder %v539, %v561
        %vm577 = vcmp.eq.f32.partialorder %v540, %v561
        %v578 = vsel %vm562, %v310, 128
        %v579 = vsel %vm563, %v311, 128
        %v580 = vsel %vm564, %v312, 128
        %v581 = vsel %vm565, %v313, 128
        %v582 = vsel %vm566, %v314, 128
        %v583 = vsel %vm567, %v315, 128
        %v584 = vsel %vm568, %v316, 128
        %v585 = vsel %vm569, %v317, 128
        %v586 = vsel %vm570, %v318, 128
        %v587 = vsel %vm571, %v319, 128
        %v588 = vsel %vm572, %v320, 128
        %v589 = vsel %vm573, %v321, 128
        %v590 = vsel %vm574, %v322, 128
        %v591 = vsel %vm575, %v323, 128
        %v592 = vsel %vm576, %v324, 128
        %v593 = vsel %vm577, %v325, 128
        %vm594 = vcmp.lt.s32.totalorder %v578, %v582
        %v595 = vsel %vm594, %v578, %v582
        %vm596 = vcmp.lt.s32.totalorder %v579, %v583
        %v597 = vsel %vm596, %v579, %v583
        %vm598 = vcmp.lt.s32.totalorder %v580, %v584
        %v599 = vsel %vm598, %v580, %v584
        %vm600 = vcmp.lt.s32.totalorder %v581, %v585
        %v601 = vsel %vm600, %v581, %v585
        %vm602 = vcmp.lt.s32.totalorder %v595, %v586
        %v603 = vsel %vm602, %v595, %v586
        %vm604 = vcmp.lt.s32.totalorder %v597, %v587
        %v605 = vsel %vm604, %v597, %v587
        %vm606 = vcmp.lt.s32.totalorder %v599, %v588
        %v607 = vsel %vm606, %v599, %v588
        %vm608 = vcmp.lt.s32.totalorder %v601, %v589
        %v609 = vsel %vm608, %v601, %v589
        %vm610 = vcmp.lt.s32.totalorder %v603, %v590
        %v611 = vsel %vm610, %v603, %v590
        %vm612 = vcmp.lt.s32.totalorder %v605, %v591
        %v613 = vsel %vm612, %v605, %v591
        %vm614 = vcmp.lt.s32.totalorder %v607, %v592
        %v615 = vsel %vm614, %v607, %v592
        %vm616 = vcmp.lt.s32.totalorder %v609, %v593
        %v617 = vsel %vm616, %v609, %v593
        %vm618 = vcmp.lt.s32.totalorder %v611, %v613
        %v619 = vsel %vm618, %v611, %v613
        %vm620 = vcmp.lt.s32.totalorder %v615, %v617
        %v621 = vsel %vm620, %v615, %v617
        %vm622 = vcmp.lt.s32.totalorder %v619, %v621
        %v623 = vsel %vm622, %v619, %v621
        %v624 = vrot.slane %v623, 4
        %vm625 = vcmp.lt.s32.totalorder %v623, %v624
        %v626 = vsel %vm625, %v623, %v624
        %v627 = vrot.slane %v626, 2
        %vm628 = vcmp.lt.s32.totalorder %v626, %v627
        %v629 = vsel %vm628, %v626, %v627
        %v630 = vrot.slane %v629, 1
        %vm631 = vcmp.lt.s32.totalorder %v629, %v630
        %v632 = vsel %vm631, %v629, %v630
        %vm633 = vcmp.eq.s32.totalorder %v310, %v632
        %vm634 = vcmp.eq.s32.totalorder %v311, %v632
        %vm635 = vcmp.eq.s32.totalorder %v312, %v632
        %vm636 = vcmp.eq.s32.totalorder %v313, %v632
        %vm637 = vcmp.eq.s32.totalorder %v314, %v632
        %vm638 = vcmp.eq.s32.totalorder %v315, %v632
        %vm639 = vcmp.eq.s32.totalorder %v316, %v632
        %vm640 = vcmp.eq.s32.totalorder %v317, %v632
        %vm641 = vcmp.eq.s32.totalorder %v318, %v632
        %vm642 = vcmp.eq.s32.totalorder %v319, %v632
        %vm643 = vcmp.eq.s32.totalorder %v320, %v632
        %vm644 = vcmp.eq.s32.totalorder %v321, %v632
        %vm645 = vcmp.eq.s32.totalorder %v322, %v632
        %vm646 = vcmp.eq.s32.totalorder %v323, %v632
        %vm647 = vcmp.eq.s32.totalorder %v324, %v632
        %vm648 = vcmp.eq.s32.totalorder %v325, %v632
        %v649 = vsel %vm633, 1, 0
        %v650 = vsel %vm634, 1, 0
        %v651 = vsel %vm635, 1, 0
        %v652 = vsel %vm636, 1, 0
        %v653 = vsel %vm637, 1, 0
        %v654 = vsel %vm638, 1, 0
        %v655 = vsel %vm639, 1, 0
        %v656 = vsel %vm640, 1, 0
        %v657 = vsel %vm641, 1, 0
        %v658 = vsel %vm642, 1, 0
        %v659 = vsel %vm643, 1, 0
        %v660 = vsel %vm644, 1, 0
        %v661 = vsel %vm645, 1, 0
        %v662 = vsel %vm646, 1, 0
        %v663 = vsel %vm647, 1, 0
        %v664 = vsel %vm648, 1, 0
        %v665 = vcvt.s32.f32 %v649
        %v666 = vcvt.s32.f32 %v650
        %v667 = vcvt.s32.f32 %v651
        %v668 = vcvt.s32.f32 %v652
        %v669 = vcvt.s32.f32 %v653
        %v670 = vcvt.s32.f32 %v654
        %v671 = vcvt.s32.f32 %v655
        %v672 = vcvt.s32.f32 %v656
        %v673 = vcvt.s32.f32 %v657
        %v674 = vcvt.s32.f32 %v658
        %v675 = vcvt.s32.f32 %v659
        %v676 = vcvt.s32.f32 %v660
        %v677 = vcvt.s32.f32 %v661
        %v678 = vcvt.s32.f32 %v662
        %v679 = vcvt.s32.f32 %v663
        %v680 = vcvt.s32.f32 %v664
        %681 = vxpose.xlu0.b32.start [1/16] %v277, 128
        %682 = vxpose.xlu0.b32.cont [2/16] %v278, 128
        %683 = vxpose.xlu0.b32.cont [3/16] %v279, 128
        %684 = vxpose.xlu0.b32.cont [4/16] %v280, 128
        %685 = vxpose.xlu0.b32.cont [5/16] %v281, 128
        %686 = vxpose.xlu0.b32.cont [6/16] %v282, 128
        %687 = vxpose.xlu0.b32.cont [7/16] %v283, 128
        %688 = vxpose.xlu0.b32.cont [8/16] %v284, 128
        %689 = vxpose.xlu0.b32.cont [9/16] %v285, 128
        %690 = vxpose.xlu0.b32.cont [10/16] %v286, 128
        %691 = vxpose.xlu0.b32.cont [11/16] %v287, 128
        %692 = vxpose.xlu0.b32.cont [12/16] %v288, 128
        %693 = vxpose.xlu0.b32.cont [13/16] %v289, 128
        %694 = vxpose.xlu0.b32.cont [14/16] %v290, 128
        %695 = vxpose.xlu0.b32.cont [15/16] %v291, 128
        %696 = vxpose.xlu0.b32.end [16/16] %v292, 128
        %v697 = vpop.trf.xlu0
        %v698 = vpop.trf.xlu0
        %v699 = vpop.trf.xlu0
        %v700 = vpop.trf.xlu0
        %v701 = vpop.trf.xlu0
        %v702 = vpop.trf.xlu0
        %v703 = vpop.trf.xlu0
        %v704 = vpop.trf.xlu0
        %v705 = vpop.trf.xlu0
        %v706 = vpop.trf.xlu0
        %v707 = vpop.trf.xlu0
        %v708 = vpop.trf.xlu0
        %v709 = vpop.trf.xlu0
        %v710 = vpop.trf.xlu0
        %v711 = vpop.trf.xlu0
        %v712 = vpop.trf.xlu0
        %713 = vmatpush.msra.mxu0 %v680
        %714 = vmatpush.msra.mxu0 %v679
        %715 = vmatpush.msra.mxu0 %v678
        %716 = vmatpush.msra.mxu0 %v677
        %717 = vmatpush.msra.mxu0 %v676
        %718 = vmatpush.msra.mxu0 %v675
        %719 = vmatpush.msra.mxu0 %v674
        %720 = vmatpush.msra.mxu0 %v673
        %721 = vmatpush.msra.mxu0 %v672
        %722 = vmatpush.msra.mxu0 %v671
        %723 = vmatpush.msra.mxu0 %v670
        %724 = vmatpush.msra.mxu0 %v669
        %725 = vmatpush.msra.mxu0 %v668
        %726 = vmatpush.msra.mxu0 %v667
        %727 = vmatpush.msra.mxu0 %v666
        %728 = vmatpush.msra.mxu0 %v665
        %729 = vmatmul.f32.gmra.mxu0 %v697
        %v730 = vpop.f32.mrf.mxu0
        %v731 = vadd.f32 0.0, %v730
        %732 = vdwg.mxu0
        %733 = vst [vmem:[%s250] sm:$0xf] %v731
        %v734 = vlaneseq
        %vm735 = vcmp.ge.s32.totalorder %v734, 0
        %vm736 = vcmp.lt.s32.totalorder %v734, 128
        %vm737 = vmand %vm735, %vm736
        %738 = vst.msk [vmem:[%s257] sm:$0x1] %vm737, %v632
        %v739 = vsub.f32 %v731, %v326
        %v740 = vmul.f32 %v739, %v739
        %v741 = vsel %vm376, %v740, 0.0
        %742 = vadd.xlane.f32.xlu0 %v741
        %v743 = vpop.xlane.xlu0 %742
        %v744 = vrot.slane %v743, 4
        %v745 = vadd.f32 %v743, %v744
        %v746 = vrot.slane %v745, 2
        %v747 = vadd.f32 %v745, %v746
        %v748 = vrot.slane %v747, 1
        %v749 = vadd.f32 %v747, %v748
        %s750 = vtos %v749
        %s751 = sadd.f32 %s750, 0.0
        %s752 = scalar_lea.vmem %s273, 4
        %v753 = vld [vmem:[%s752] sm:$0xf]
        %v755 = vsel %vm376, %v753, 0
        %757 = vmatpush.msra.mxu0 0.0
        %758 = vmatpush.msra.mxu0 0.0
        %759 = vmatpush.msra.mxu0 0.0
        %760 = vmatpush.msra.mxu0 0.0
        %761 = vmatpush.msra.mxu0 0.0
        %762 = vmatpush.msra.mxu0 0.0
        %763 = vmatpush.msra.mxu0 0.0
        %764 = vmatpush.msra.mxu0 0.0
        %765 = vmatpush.msra.mxu0 0.0
        %766 = vmatpush.msra.mxu0 0.0
        %767 = vmatpush.msra.mxu0 0.0
        %768 = vmatpush.msra.mxu0 0.0
        %769 = vmatpush.msra.mxu0 0.0
        %770 = vmatpush.msra.mxu0 0.0
        %771 = vmatpush.msra.mxu0 0.0
        %772 = vmatpush.msra.mxu0 %v755
        %773 = vmatmul.f32.gmra.mxu0 %v329
        %v774 = vpop.f32.mrf.mxu0
        %v775 = vadd.f32 0.0, %v774
        %776 = vmatmul.f32.gmra.mxu0 %v332
        %v777 = vpop.f32.mrf.mxu0
        %v778 = vadd.f32 0.0, %v777
        %779 = vmatmul.f32.gmra.mxu0 %v335
        %v780 = vpop.f32.mrf.mxu0
        %v781 = vadd.f32 0.0, %v780
        %782 = vmatmul.f32.gmra.mxu0 %v338
        %v783 = vpop.f32.mrf.mxu0
        %v784 = vadd.f32 0.0, %v783
        %785 = vmatmul.f32.gmra.mxu0 %v341
        %v786 = vpop.f32.mrf.mxu0
        %v787 = vadd.f32 0.0, %v786
        %788 = vmatmul.f32.gmra.mxu0 %v344
        %v789 = vpop.f32.mrf.mxu0
        %v790 = vadd.f32 0.0, %v789
        %791 = vmatmul.f32.gmra.mxu0 %v347
        %v792 = vpop.f32.mrf.mxu0
        %v793 = vadd.f32 0.0, %v792
        %794 = vmatmul.f32.gmra.mxu0 %v350
        %v795 = vpop.f32.mrf.mxu0
        %v796 = vadd.f32 0.0, %v795
        %797 = vmatmul.f32.gmra.mxu0 %v353
        %v798 = vpop.f32.mrf.mxu0
        %v799 = vadd.f32 0.0, %v798
        %800 = vmatmul.f32.gmra.mxu0 %v356
        %v801 = vpop.f32.mrf.mxu0
        %v802 = vadd.f32 0.0, %v801
        %803 = vmatmul.f32.gmra.mxu0 %v359
        %v804 = vpop.f32.mrf.mxu0
        %v805 = vadd.f32 0.0, %v804
        %806 = vmatmul.f32.gmra.mxu0 %v362
        %v807 = vpop.f32.mrf.mxu0
        %v808 = vadd.f32 0.0, %v807
        %809 = vmatmul.f32.gmra.mxu0 %v365
        %v810 = vpop.f32.mrf.mxu0
        %v811 = vadd.f32 0.0, %v810
        %812 = vmatmul.f32.gmra.mxu0 %v368
        %v813 = vpop.f32.mrf.mxu0
        %v814 = vadd.f32 0.0, %v813
        %815 = vmatmul.f32.gmra.mxu0 %v371
        %v816 = vpop.f32.mrf.mxu0
        %v817 = vadd.f32 0.0, %v816
        %818 = vmatmul.f32.gmra.mxu0 %v374
        %v819 = vpop.f32.mrf.mxu0
        %v820 = vadd.f32 0.0, %v819
        %821 = vdwg.mxu0
        %v822 = vsub.f32 %v448, %v775
        %v823 = vsub.f32 %v453, %v778
        %v824 = vsub.f32 %v458, %v781
        %v825 = vsub.f32 %v463, %v784
        %v826 = vsub.f32 %v468, %v787
        %v827 = vsub.f32 %v473, %v790
        %v828 = vsub.f32 %v478, %v793
        %v829 = vsub.f32 %v483, %v796
        %v830 = vsub.f32 %v488, %v799
        %v831 = vsub.f32 %v493, %v802
        %v832 = vsub.f32 %v498, %v805
        %v833 = vsub.f32 %v503, %v808
        %v834 = vsub.f32 %v508, %v811
        %v835 = vsub.f32 %v513, %v814
        %v836 = vsub.f32 %v518, %v817
        %v837 = vsub.f32 %v523, %v820
        %v838 = vmin.f32 %v822, %v826
        %v839 = vmin.f32 %v823, %v827
        %v840 = vmin.f32 %v824, %v828
        %v841 = vmin.f32 %v825, %v829
        %v842 = vmin.f32 %v838, %v830
        %v843 = vmin.f32 %v839, %v831
        %v844 = vmin.f32 %v840, %v832
        %v845 = vmin.f32 %v841, %v833
        %v846 = vmin.f32 %v842, %v834
        %v847 = vmin.f32 %v843, %v835
        %v848 = vmin.f32 %v844, %v836
        %v849 = vmin.f32 %v845, %v837
        %v850 = vmin.f32 %v846, %v847
        %v851 = vmin.f32 %v848, %v849
        %v852 = vmin.f32 %v850, %v851
        %v853 = vrot.slane %v852, 4
        %v854 = vmin.f32 %v852, %v853
        %v855 = vrot.slane %v854, 2
        %v856 = vmin.f32 %v854, %v855
        %v857 = vrot.slane %v856, 1
        %v858 = vmin.f32 %v856, %v857
        %vm859 = vcmp.eq.f32.partialorder %v822, %v858
        %vm860 = vcmp.eq.f32.partialorder %v823, %v858
        %vm861 = vcmp.eq.f32.partialorder %v824, %v858
        %vm862 = vcmp.eq.f32.partialorder %v825, %v858
        %vm863 = vcmp.eq.f32.partialorder %v826, %v858
        %vm864 = vcmp.eq.f32.partialorder %v827, %v858
        %vm865 = vcmp.eq.f32.partialorder %v828, %v858
        %vm866 = vcmp.eq.f32.partialorder %v829, %v858
        %vm867 = vcmp.eq.f32.partialorder %v830, %v858
        %vm868 = vcmp.eq.f32.partialorder %v831, %v858
        %vm869 = vcmp.eq.f32.partialorder %v832, %v858
        %vm870 = vcmp.eq.f32.partialorder %v833, %v858
        %vm871 = vcmp.eq.f32.partialorder %v834, %v858
        %vm872 = vcmp.eq.f32.partialorder %v835, %v858
        %vm873 = vcmp.eq.f32.partialorder %v836, %v858
        %vm874 = vcmp.eq.f32.partialorder %v837, %v858
        %v875 = vsel %vm859, %v310, 128
        %v876 = vsel %vm860, %v311, 128
        %v877 = vsel %vm861, %v312, 128
        %v878 = vsel %vm862, %v313, 128
        %v879 = vsel %vm863, %v314, 128
        %v880 = vsel %vm864, %v315, 128
        %v881 = vsel %vm865, %v316, 128
        %v882 = vsel %vm866, %v317, 128
        %v883 = vsel %vm867, %v318, 128
        %v884 = vsel %vm868, %v319, 128
        %v885 = vsel %vm869, %v320, 128
        %v886 = vsel %vm870, %v321, 128
        %v887 = vsel %vm871, %v322, 128
        %v888 = vsel %vm872, %v323, 128
        %v889 = vsel %vm873, %v324, 128
        %v890 = vsel %vm874, %v325, 128
        %vm891 = vcmp.lt.s32.totalorder %v875, %v879
        %v892 = vsel %vm891, %v875, %v879
        %vm893 = vcmp.lt.s32.totalorder %v876, %v880
        %v894 = vsel %vm893, %v876, %v880
        %vm895 = vcmp.lt.s32.totalorder %v877, %v881
        %v896 = vsel %vm895, %v877, %v881
        %vm897 = vcmp.lt.s32.totalorder %v878, %v882
        %v898 = vsel %vm897, %v878, %v882
        %vm899 = vcmp.lt.s32.totalorder %v892, %v883
        %v900 = vsel %vm899, %v892, %v883
        %vm901 = vcmp.lt.s32.totalorder %v894, %v884
        %v902 = vsel %vm901, %v894, %v884
        %vm903 = vcmp.lt.s32.totalorder %v896, %v885
        %v904 = vsel %vm903, %v896, %v885
        %vm905 = vcmp.lt.s32.totalorder %v898, %v886
        %v906 = vsel %vm905, %v898, %v886
        %vm907 = vcmp.lt.s32.totalorder %v900, %v887
        %v908 = vsel %vm907, %v900, %v887
        %vm909 = vcmp.lt.s32.totalorder %v902, %v888
        %v910 = vsel %vm909, %v902, %v888
        %vm911 = vcmp.lt.s32.totalorder %v904, %v889
        %v912 = vsel %vm911, %v904, %v889
        %vm913 = vcmp.lt.s32.totalorder %v906, %v890
        %v914 = vsel %vm913, %v906, %v890
        %vm915 = vcmp.lt.s32.totalorder %v908, %v910
        %v916 = vsel %vm915, %v908, %v910
        %vm917 = vcmp.lt.s32.totalorder %v912, %v914
        %v918 = vsel %vm917, %v912, %v914
        %vm919 = vcmp.lt.s32.totalorder %v916, %v918
        %v920 = vsel %vm919, %v916, %v918
        %v921 = vrot.slane %v920, 4
        %vm922 = vcmp.lt.s32.totalorder %v920, %v921
        %v923 = vsel %vm922, %v920, %v921
        %v924 = vrot.slane %v923, 2
        %vm925 = vcmp.lt.s32.totalorder %v923, %v924
        %v926 = vsel %vm925, %v923, %v924
        %v927 = vrot.slane %v926, 1
        %vm928 = vcmp.lt.s32.totalorder %v926, %v927
        %v929 = vsel %vm928, %v926, %v927
        %vm930 = vcmp.eq.s32.totalorder %v310, %v929
        %vm931 = vcmp.eq.s32.totalorder %v311, %v929
        %vm932 = vcmp.eq.s32.totalorder %v312, %v929
        %vm933 = vcmp.eq.s32.totalorder %v313, %v929
        %vm934 = vcmp.eq.s32.totalorder %v314, %v929
        %vm935 = vcmp.eq.s32.totalorder %v315, %v929
        %vm936 = vcmp.eq.s32.totalorder %v316, %v929
        %vm937 = vcmp.eq.s32.totalorder %v317, %v929
        %vm938 = vcmp.eq.s32.totalorder %v318, %v929
        %vm939 = vcmp.eq.s32.totalorder %v319, %v929
        %vm940 = vcmp.eq.s32.totalorder %v320, %v929
        %vm941 = vcmp.eq.s32.totalorder %v321, %v929
        %vm942 = vcmp.eq.s32.totalorder %v322, %v929
        %vm943 = vcmp.eq.s32.totalorder %v323, %v929
        %vm944 = vcmp.eq.s32.totalorder %v324, %v929
        %vm945 = vcmp.eq.s32.totalorder %v325, %v929
        %v946 = vsel %vm930, 1, 0
        %v947 = vsel %vm931, 1, 0
        %v948 = vsel %vm932, 1, 0
        %v949 = vsel %vm933, 1, 0
        %v950 = vsel %vm934, 1, 0
        %v951 = vsel %vm935, 1, 0
        %v952 = vsel %vm936, 1, 0
        %v953 = vsel %vm937, 1, 0
        %v954 = vsel %vm938, 1, 0
        %v955 = vsel %vm939, 1, 0
        %v956 = vsel %vm940, 1, 0
        %v957 = vsel %vm941, 1, 0
        %v958 = vsel %vm942, 1, 0
        %v959 = vsel %vm943, 1, 0
        %v960 = vsel %vm944, 1, 0
        %v961 = vsel %vm945, 1, 0
        %v962 = vcvt.s32.f32 %v946
        %v963 = vcvt.s32.f32 %v947
        %v964 = vcvt.s32.f32 %v948
        %v965 = vcvt.s32.f32 %v949
        %v966 = vcvt.s32.f32 %v950
        %v967 = vcvt.s32.f32 %v951
        %v968 = vcvt.s32.f32 %v952
        %v969 = vcvt.s32.f32 %v953
        %v970 = vcvt.s32.f32 %v954
        %v971 = vcvt.s32.f32 %v955
        %v972 = vcvt.s32.f32 %v956
        %v973 = vcvt.s32.f32 %v957
        %v974 = vcvt.s32.f32 %v958
        %v975 = vcvt.s32.f32 %v959
        %v976 = vcvt.s32.f32 %v960
        %v977 = vcvt.s32.f32 %v961
        %978 = vmatpush.msra.mxu0 %v977
        %979 = vmatpush.msra.mxu0 %v976
        %980 = vmatpush.msra.mxu0 %v975
        %981 = vmatpush.msra.mxu0 %v974
        %982 = vmatpush.msra.mxu0 %v973
        %983 = vmatpush.msra.mxu0 %v972
        %984 = vmatpush.msra.mxu0 %v971
        %985 = vmatpush.msra.mxu0 %v970
        %986 = vmatpush.msra.mxu0 %v969
        %987 = vmatpush.msra.mxu0 %v968
        %988 = vmatpush.msra.mxu0 %v967
        %989 = vmatpush.msra.mxu0 %v966
        %990 = vmatpush.msra.mxu0 %v965
        %991 = vmatpush.msra.mxu0 %v964
        %992 = vmatpush.msra.mxu0 %v963
        %993 = vmatpush.msra.mxu0 %v962
        %994 = vmatmul.f32.gmra.mxu0 %v697
        %v995 = vpop.f32.mrf.mxu0
        %v996 = vadd.f32 0.0, %v995
        %997 = vdwg.mxu0
        %s998 = scalar_lea.vmem %s250, 4 [#allocation2]
        %999 = vst [vmem:[%s998] sm:$0xf] %v996
        %s1000 = scalar_lea.vmem %s257, 1 [#allocation4]
        %1001 = vst.msk [vmem:[%s1000] sm:$0x1] %vm737, %v929
        %v1002 = vsub.f32 %v996, %v753
        %v1003 = vmul.f32 %v1002, %v1002
        %v1004 = vsel %vm376, %v1003, 0.0
        %1005 = vadd.xlane.f32.xlu0 %v1004
        %v1006 = vpop.xlane.xlu0 %1005
        %v1007 = vrot.slane %v1006, 4
        %v1008 = vadd.f32 %v1006, %v1007
        %v1009 = vrot.slane %v1008, 2
        %v1010 = vadd.f32 %v1008, %v1009
        %v1011 = vrot.slane %v1010, 1
        %v1012 = vadd.f32 %v1010, %v1011
        %s1013 = vtos %v1012
        %s1014 = sadd.f32 %s751, %s1013
        %v1015 = vstv %s1014
        %1016 = vst [vmem:[%s264] sm:$0xff] %v1015
        %s1017 = sand.u32 %s115, 1
        %s1018 = scalar_lea.sflag [#allocation3], %s1017
        %s1019 = sand.u32 %s115, 1
        %s1020 = smul.addr %s1019, 8
        %s1021 = scalar_lea.vmem [#allocation2], %s1020
        %s1022 = sand.u32 %s23, 1
        %s1023 = scalar_lea.sflag [#allocation5], %s1022
        %s1024 = sand.u32 %s143, 1
        %s1025 = smul.addr %s1024, 2
        %s1026 = scalar_lea.vmem [#allocation4], %s1025
        %s1027 = sand.u32 %s23, 1
        %s1028 = scalar_lea.sflag [#allocation5], %s1027
        %s1029 = sand.u32 %s171, 1
        %s1030 = smul.addr %s1029, 8
        %s1031 = scalar_lea.vmem [#allocation6], %s1030
        // Predicated region
        $region33: #{tpu_custom_call.1} parent=31 // pred_check
          %p1032 = pneg %p125
        $region34: #{tpu_custom_call.1} parent=31 // pred_check_branch
          %1034 = sbr.rel (%p1032) target = $region36
        $region35: #{tpu_custom_call.1} parent=31 // pred_region
          %s1035 = smul.u32 2, %s28
          %1037 = vsyncadd %s1018, 0
          %s1038 = smul.addr %s27, 2
          %s1039 = sadd.s32 %s1035, %s1038
          %s1040 = smul.addr %s1039, 4
          %s1041 = scalar_lea.hbm %s3, %s1040
          %s1043 = sshll.u32 %s1021, 4
          %s1044 = int_to_ptr.vmem [resolvable:$true] %s1043
          %s1045 = sshll.u32 %s1041, 4
          %s1046 = int_to_ptr.hbm [resolvable:$true] %s1045
          %1048 = dma.vmem_to_hbm [thread:$0]  %s1044, 128, %s1046, %s1018
        $region36: #{tpu_custom_call.1} parent=31 // pred_fallthru
          _
        // Predicated region
        $region37: #{tpu_custom_call.1} parent=31 // pred_check
          %p1049 = pneg %p153
        $region38: #{tpu_custom_call.1} parent=31 // pred_check_branch
          %1051 = sbr.rel (%p1049) target = $region40
        $region39: #{tpu_custom_call.1} parent=31 // pred_region
          %s1052 = smul.u32 2, %s28
          %1054 = vsyncadd %s1023, 0
          %s1055 = smul.addr %s27, 2
          %s1056 = sadd.s32 %s1052, %s1055
          %s1057 = scalar_lea.hbm %s4, %s1056
          %s1059 = sshll.u32 %s1026, 4
          %s1060 = int_to_ptr.vmem [resolvable:$true] %s1059
          %s1061 = sshll.u32 %s1057, 4
          %s1062 = int_to_ptr.hbm [resolvable:$true] %s1061
          %1064 = dma.vmem_to_hbm [thread:$0]  %s1060, 32, %s1062, %s1023
        $region40: #{tpu_custom_call.1} parent=31 // pred_fallthru
          _
        // Predicated region
        $region41: #{tpu_custom_call.1} parent=31 // pred_check
          %p1065 = pneg %p181
        $region42: #{tpu_custom_call.1} parent=31 // pred_check_branch
          %1067 = sbr.rel (%p1065) target = $region44
        $region43: #{tpu_custom_call.1} parent=31 // pred_region
          %1069 = vsyncadd %s1028, 0
          %s1070 = sadd.s32 %s28, %s27
          %s1071 = smul.addr %s1070, 8
          %s1072 = scalar_lea.hbm %s5, %s1071
          %s1074 = sshll.u32 %s1031, 4
          %s1075 = int_to_ptr.vmem [resolvable:$true] %s1074
          %s1076 = sshll.u32 %s1072, 4
          %s1077 = int_to_ptr.hbm [resolvable:$true] %s1076
          %1079 = dma.vmem_to_hbm [thread:$0]  %s1075, 128, %s1077, %s1028
        $region44: #{tpu_custom_call.1} parent=31 // pred_fallthru
          _
      $region32: #{tpu_custom_call.1} parent=5 // pred_fallthru
        _
      %p1080 = scmp.le.s32.totalorder 2, %s18
      // Predicated region
      $region45: #{tpu_custom_call.1} parent=5 // pred_check
        %p1081 = pneg %p1080
      $region46: #{tpu_custom_call.1} parent=5 // pred_check_branch
        %1083 = sbr.rel (%p1081) target = $region48
      $region47: #{tpu_custom_call.1} parent=5 // pred_region
        %s1084 = ssub.s32 %s18, 2
        // Predicated region
        $region49: #{tpu_custom_call.1} parent=47 // pred_check
          %p1085 = pneg %p131
        $region50: #{tpu_custom_call.1} parent=47 // pred_check_branch
          %1087 = sbr.rel (%p1085) target = $region52
        $region51: #{tpu_custom_call.1} parent=47 // pred_region
          %s1088 = sand.u32 %s116, 1
          %s1089 = scalar_lea.sflag [#allocation3], %s1088
          %s1090 = sand.u32 %s116, 1
          %s1091 = smul.addr %s1090, 8
          %s1092 = scalar_lea.vmem [#allocation2], %s1091
          %1094 = dma.done %s1089, 128
        $region52: #{tpu_custom_call.1} parent=47 // pred_fallthru
          _
        // Predicated region
        $region53: #{tpu_custom_call.1} parent=47 // pred_check
          %p1095 = pneg %p159
        $region54: #{tpu_custom_call.1} parent=47 // pred_check_branch
          %1097 = sbr.rel (%p1095) target = $region56
        $region55: #{tpu_custom_call.1} parent=47 // pred_region
          %s1098 = sand.u32 %s24, 1
          %s1099 = scalar_lea.sflag [#allocation5], %s1098
          %s1100 = sand.u32 %s144, 1
          %s1101 = smul.addr %s1100, 2
          %s1102 = scalar_lea.vmem [#allocation4], %s1101
          %1104 = dma.done %s1099, 32
        $region56: #{tpu_custom_call.1} parent=47 // pred_fallthru
          _
        // Predicated region
        $region57: #{tpu_custom_call.1} parent=47 // pred_check
          %p1105 = pneg %p187
        $region58: #{tpu_custom_call.1} parent=47 // pred_check_branch
          %1107 = sbr.rel (%p1105) target = $region60
        $region59: #{tpu_custom_call.1} parent=47 // pred_region
          %s1108 = sand.u32 %s24, 1
          %s1109 = scalar_lea.sflag [#allocation5], %s1108
          %s1110 = sand.u32 %s172, 1
          %s1111 = smul.addr %s1110, 8
          %s1112 = scalar_lea.vmem [#allocation6], %s1111
          %1114 = dma.done %s1109, 128
        $region60: #{tpu_custom_call.1} parent=47 // pred_fallthru
          _
      $region48: #{tpu_custom_call.1} parent=5 // pred_fallthru
        _
    $region6: #{tpu_custom_call.1} parent=1 // loop_footer
      %s22 = sadd.s32 1, %s18
    $region7: #{tpu_custom_call.1} parent=1 // loop_footer_branch
      %17 = sbr.rel target = $region3
    $region8: #{tpu_custom_call.1} parent=1 // loop_exit
      _
    %1115 = vsyncpa [#allocation3], 1
    %s1116 = scalar_lea.sflag [#allocation3], 1
    %1117 = vsyncpa %s1116, 1
    %1118 = vsyncpa [#allocation5], 1
    %s1119 = scalar_lea.sflag [#allocation5], 1
    %1120 = vsyncpa %s1119, 1

</llo_original>
